<compile_context>
chip_gen: v6e
topology: v6e:2x2x1
jax: 0.10.0
libtpu: 0.0.40
codegen_flags: <defaults>
</compile_context>

<pallas_src>
import functools

import jax
import jax.numpy as jnp
from jax.experimental import pallas as pl
from jax.experimental.pallas import tpu as pltpu


def _round_up(x: int, m: int) -> int:
    return ((x + m - 1) // m) * m


def _sublane_min(dtype) -> int:
    """Minimum sublane multiple for a dtype (sub-32-bit dtypes pack sublanes)."""
    return {4: 8, 2: 16, 1: 32}.get(jnp.dtype(dtype).itemsize, 8)


# ---------------------------------------------------------------------------
# Kernels: one (tm, tn) output tile, grid = (M_tiles, N_tiles, K_tiles).
# ---------------------------------------------------------------------------
def _matmul_bias_kernel_accout(x_ref, w_ref, b_ref, o_ref):
    """f32 output: accumulate directly into the resident output block."""
    k = pl.program_id(2)

    @pl.when(k == 0)
    def _init():
        # Bias applied exactly once, as the accumulator's initial value.
        o_ref[...] = jnp.broadcast_to(b_ref[...].astype(jnp.float32), o_ref.shape)

    o_ref[...] += jnp.dot(
        x_ref[...], w_ref[...], preferred_element_type=jnp.float32
    )


def _matmul_bias_kernel_scratch(x_ref, w_ref, b_ref, o_ref, acc_ref):
    """Narrow output dtype: f32 accumulator scratch, single cast at the end."""
    k = pl.program_id(2)

    @pl.when(k == 0)
    def _init():
        acc_ref[...] = jnp.zeros_like(acc_ref)

    acc_ref[...] += jnp.dot(
        x_ref[...], w_ref[...], preferred_element_type=jnp.float32
    )

    @pl.when(k == pl.num_programs(2) - 1)
    def _finalize():
        o_ref[...] = (acc_ref[...] + b_ref[...].astype(jnp.float32)).astype(
            o_ref.dtype
        )


# ---------------------------------------------------------------------------
# Tile planning under an explicit VMEM footprint budget.
# ---------------------------------------------------------------------------
_VMEM_TILE_BUDGET = 40 * 1024 * 1024  # safe on v7x (64 MiB physical VMEM / TC)


def _plan_tiles(Mp, Kp, Np, in_itemsize, out_itemsize, sub_min, use_acc):
    tm_cands = [c for c in (512, 256, 128, 64, 32, 16, 8)
                if c <= Mp and Mp % c == 0 and c % sub_min == 0] or [Mp]
    tn_cands = [c for c in (1024, 512, 256, 128)
                if c <= Np and Np % c == 0] or [Np]
    tk_cands = [c for c in (2048, 1024, 512, 256, 128)
                if c <= Kp and Kp % c == 0] or [Kp]

    def footprint(tm, tn, tk):
        b = 2 * (tm * tk + tk * tn + 8 * tn) * in_itemsize  # double-buffered inputs
        b += 2 * tm * tn * out_itemsize                     # double-buffered output
        if use_acc:
            b += tm * tn * 4                                # f32 accumulator scratch
        return b

    # Candidates are largest-first; take the first combination under budget.
    tm, tn, tk = tm_cands[-1], tn_cands[-1], tk_cands[-1]
    done = False
    for cm in tm_cands:
        for cn in tn_cands:
            for ck in tk_cands:
                if footprint(cm, cn, ck) <= _VMEM_TILE_BUDGET:
                    tm, tn, tk = cm, cn, ck
                    done = True
                    break
            if done:
                break
        if done:
            break

    # Megacore (v7x: 2 TensorCores): prefer >= 2 tiles along a parallel axis,
    # but never shrink a tile below 256 (the v6e/v7x MXU pass is 256x256).
    if (Mp // tm) * (Np // tn) < 2:
        if tn >= 512 and Np % (tn // 2) == 0:
            tn //= 2
        elif tm >= 512 and Mp % (tm // 2) == 0:
            tm //= 2

    return tm, tn, tk, footprint(tm, tn, tk)


# ---------------------------------------------------------------------------
# Wrappers.
# ---------------------------------------------------------------------------
def fold_branches(weights, biases):
    """Fold F Linear branches once:  sum_f (x @ W_f + b_f) == x @ W_sum + b_sum.

    Hoist this out of the per-call path when weights are static (inference).
    Only valid for homogeneous Linear branches.
    """
    return jnp.sum(weights, axis=0), jnp.sum(biases, axis=0)


@jax.jit
def parallel_sum_folded(x, w_sum, b_sum):
    """out = x @ w_sum + b_sum   (x: [M, K], w_sum: [K, N], b_sum: [N])."""
    M, K = x.shape
    K2, N = w_sum.shape
    assert K2 == K and b_sum.shape == (N,)

    in_dtype = x.dtype
    out_dtype = x.dtype
    sub_min = _sublane_min(in_dtype)

    Mp = _round_up(M, sub_min)
    Kp = _round_up(K, 128)
    Np = _round_up(N, 128)

    # Skip pad copies entirely when already aligned (no extra HBM pass).
    x_p = x if (Mp == M and Kp == K) else jnp.pad(x, ((0, Mp - M), (0, Kp - K)))
    w_p = (w_sum if (Kp == K and Np == N)
           else jnp.pad(w_sum, ((0, Kp - K), (0, Np - N))))
    b_row = (b_sum if Np == N else jnp.pad(b_sum, ((0, Np - N),)))[None, :]

    out_is_f32 = jnp.dtype(out_dtype) == jnp.float32
    use_acc = not out_is_f32

    in_itemsize = jnp.dtype(in_dtype).itemsize
    w_itemsize = jnp.dtype(w_sum.dtype).itemsize
    b_itemsize = jnp.dtype(b_sum.dtype).itemsize
    out_itemsize = jnp.dtype(out_dtype).itemsize

    tm, tn, tk, fp_bytes = _plan_tiles(
        Mp, Kp, Np, in_itemsize, out_itemsize, sub_min, use_acc
    )
    grid = (Mp // tm, Np // tn, Kp // tk)

    # Explicit VMEM limit: actual tile footprint + headroom (<= v7x physical).
    vmem_limit = int(min(max(fp_bytes + (8 << 20), 32 << 20), 60 << 20))

    # Deeper buffering of the weight stream for small-M (decode-like) shapes,
    # where the W_sum DMA dominates; only when there are enough steps.
    w_steps = grid[1] * grid[2]
    if Mp <= 256 and w_steps >= 3:
        w_spec = pl.BlockSpec((tk, tn), lambda i, j, k: (k, j),
                              pipeline_mode=pl.Buffered(3))
    else:
        w_spec = pl.BlockSpec((tk, tn), lambda i, j, k: (k, j))

    # Advisory cost: x re-read once per N tile, W_sum once per M tile.
    cost = pl.CostEstimate(
        flops=2 * Mp * Kp * Np,
        transcendentals=0,
        bytes_accessed=(Mp * Kp * in_itemsize * grid[1]
                        + Kp * Np * w_itemsize * grid[0]
                        + Np * b_itemsize * grid[0]
                        + Mp * Np * out_itemsize),
    )

    kernel = _matmul_bias_kernel_accout if out_is_f32 else _matmul_bias_kernel_scratch
    scratch = [] if out_is_f32 else [pltpu.VMEM((tm, tn), jnp.float32)]

    out_p = pl.pallas_call(
        kernel,
        out_shape=jax.ShapeDtypeStruct((Mp, Np), out_dtype),
        grid_spec=pltpu.PrefetchScalarGridSpec(
            num_scalar_prefetch=0,
            grid=grid,
            in_specs=[
                pl.BlockSpec((tm, tk), lambda i, j, k: (i, k)),  # x tile
                w_spec,                                          # weight tile
                pl.BlockSpec((1, tn), lambda i, j, k: (0, j)),   # bias row
            ],
            out_specs=pl.BlockSpec((tm, tn), lambda i, j, k: (i, j)),
            scratch_shapes=scratch,
        ),
        compiler_params=pltpu.CompilerParams(
            # M / N tiles are independent -> megacore-parallel on v7x;
            # K is the reduction -> arbitrary (and last in the grid).
            dimension_semantics=("parallel", "parallel", "arbitrary"),
            vmem_limit_bytes=vmem_limit,
        ),
        cost_estimate=cost,
    )(x_p, w_p, b_row)

    if Mp == M and Np == N:
        return out_p
    return out_p[:M, :N]


def parallel_sum(x, weights, biases):
    """Convenience: fold + run.  Prefer fold_branches() once for static weights."""
    w_sum, b_sum = fold_branches(weights, biases)
    return parallel_sum_folded(x, w_sum, b_sum)


if __name__ == "__main__":
    # Small synthetic shapes: batch=2, seq=8, hidden=32, num_fns=3.
    B, S, H, NUM_FNS = 2, 8, 32, 3
    key = jax.random.PRNGKey(0)
    kx, kw, kb = jax.random.split(key, 3)

    x = jax.random.normal(kx, (B, S, H), dtype=jnp.float32)
    # Deterministic parameter init (Linear weights stored pre-transposed).
    weights = jax.random.normal(kw, (NUM_FNS, H, H), dtype=jnp.float32) * 0.05
    biases = jax.random.normal(kb, (NUM_FNS, H), dtype=jnp.float32) * 0.05

    x2d = x.reshape(B * S, H)  # [M, K]

    # Fold the branch sum ONCE (hoisted out of the per-call path, as you'd do
    # for static inference weights), then run the single fused matmul kernel.
    w_sum, b_sum = fold_branches(weights, biases)
    out = parallel_sum_folded(x2d, w_sum, b_sum)
    out = jax.block_until_ready(out).reshape(B, S, H)

    # Pure-JAX reference of ParallelSum(Linear_0, ..., Linear_{F-1}).
    ref = sum(x @ weights[f] + biases[f] for f in range(NUM_FNS))
    assert jnp.allclose(out, ref, atol=1e-4, rtol=1e-4), "mismatch vs reference"

    print("KERNEL_OK")
</pallas_src>

<mosaic_0001>
module attributes {stable_mosaic.version = 11 : i64} {
  func.func @_matmul_bias_kernel_accout(%arg0: i32, %arg1: i32, %arg2: i32, %arg3: memref<16x128xf32, #tpu.memory_space<vmem>>, %arg4: memref<128x128xf32, #tpu.memory_space<vmem>>, %arg5: memref<1x128xf32, #tpu.memory_space<vmem>>, %arg6: memref<16x128xf32, #tpu.memory_space<vmem>>) attributes {dimension_semantics = [#tpu.dimension_semantics<parallel>, #tpu.dimension_semantics<parallel>, #tpu.dimension_semantics<arbitrary>], iteration_bounds = array<i64: 1, 1, 1>, scalar_prefetch = 0 : i64, scratch_operands = 0 : i64, tpu.core_type = #tpu.core_type<tc>, window_params = [{transform_indices = @transform_0, window_bounds = array<i64: 16, 128>}, {transform_indices = @transform_1, window_bounds = array<i64: 128, 128>}, {transform_indices = @transform_2, window_bounds = array<i64: 1, 128>}, {transform_indices = @transform_3, window_bounds = array<i64: 16, 128>}]} {
    %c0_i32 = arith.constant 0 : i32
    %0 = arith.cmpi eq, %arg2, %c0_i32 : i32
    %1 = arith.extui %0 : i1 to i32
    %c0_i32_0 = arith.constant 0 : i32
    %2 = arith.cmpi ne, %1, %c0_i32_0 : i32
    scf.if %2 {
      %c0_8 = arith.constant 0 : index
      %c0_9 = arith.constant 0 : index
      %9 = vector.load %arg5[%c0_8, %c0_9] : memref<1x128xf32, #tpu.memory_space<vmem>>, vector<1x128xf32>
      %10 = vector.shape_cast %9 : vector<1x128xf32> to vector<1x128xf32>
      %11 = vector.broadcast %10 : vector<1x128xf32> to vector<16x128xf32>
      %c0_10 = arith.constant 0 : index
      %c0_11 = arith.constant 0 : index
      %12 = vector.load %arg6[%c0_10, %c0_11] : memref<16x128xf32, #tpu.memory_space<vmem>>, vector<16x128xf32>
      tpu.vector_store %arg6[%c0_10, %c0_11], %11 {strides = array<i32>} : memref<16x128xf32, #tpu.memory_space<vmem>>, vector<16x128xf32>,
    } else {
    }
    %c0 = arith.constant 0 : index
    %c0_1 = arith.constant 0 : index
    %3 = vector.load %arg6[%c0, %c0_1] : memref<16x128xf32, #tpu.memory_space<vmem>>, vector<16x128xf32>
    %c0_2 = arith.constant 0 : index
    %c0_3 = arith.constant 0 : index
    %4 = vector.load %arg3[%c0_2, %c0_3] : memref<16x128xf32, #tpu.memory_space<vmem>>, vector<16x128xf32>
    %c0_4 = arith.constant 0 : index
    %c0_5 = arith.constant 0 : index
    %5 = vector.load %arg4[%c0_4, %c0_5] : memref<128x128xf32, #tpu.memory_space<vmem>>, vector<128x128xf32>
    %cst = arith.constant dense<0.000000e+00> : vector<16x128xf32>
    %6 = tpu.matmul %4, %5, %cst {dimension_numbers = #tpu.dot_dimension_numbers<[1], [0], [0], [1], [0, 0, 1, 1], [], []>} : vector<16x128xf32>, vector<128x128xf32>, vector<16x128xf32> -> vector<16x128xf32>
    %7 = arith.addf %3, %6 : vector<16x128xf32>
    %c0_6 = arith.constant 0 : index
    %c0_7 = arith.constant 0 : index
    %8 = vector.load %arg6[%c0_6, %c0_7] : memref<16x128xf32, #tpu.memory_space<vmem>>, vector<16x128xf32>
    tpu.vector_store %arg6[%c0_6, %c0_7], %7 {strides = array<i32>} : memref<16x128xf32, #tpu.memory_space<vmem>>, vector<16x128xf32>,
    return
  }
  func.func @transform_0(%arg0: i32, %arg1: i32, %arg2: i32) -> (i32, i32) {
    %c0_i32 = arith.constant 0 : i32
    return %arg0, %arg2 : i32, i32
  }
  func.func @transform_1(%arg0: i32, %arg1: i32, %arg2: i32) -> (i32, i32) {
    %c0_i32 = arith.constant 0 : i32
    return %arg2, %arg1 : i32, i32
  }
  func.func @transform_2(%arg0: i32, %arg1: i32, %arg2: i32) -> (i32, i32) {
    %c0_i32 = arith.constant 0 : i32
    %c0_i32_0 = arith.constant 0 : i32
    return %c0_i32, %arg1 : i32, i32
  }
  func.func @transform_3(%arg0: i32, %arg1: i32, %arg2: i32) -> (i32, i32) {
    %c0_i32 = arith.constant 0 : i32
    return %arg0, %arg1 : i32, i32
  }
}

</mosaic_0001>

<llo_original>
// kernel: parallel_sum_folded.1
$region0: #{parallel_sum_folded.1}
  #allocation0 [shape = 'u32[]', space=smem, size = 0x4, offset = 0x4, fixed_abs, tag = 'smem constant byte address 0x4 - core index']
  #allocation1 [shape = 'u32[144,128]{1,0:T(1,128)}', space=vmem, size = 0x12000, scoped, tag = 'internal scratch']
  %s0 = inlined_call_operand.vmem [shape: f32[16,128], index: 0, kind: input, shape index: {}]
  %s1 = inlined_call_operand.vmem [shape: f32[128,128], index: 1, kind: input, shape index: {}]
  %s2 = inlined_call_operand.vmem [shape: f32[1,128], index: 2, kind: input, shape index: {}]
  %s3 = inlined_call_operand.hbm [shape: f32[16,128], index: 3, kind: output, shape index: {}]
  %s4 = sld [smem:[#allocation0]]
  $region26: #{parallel_sum_folded.1} parent=0
    _
  %s6 = ssub.s32 1, %s4
  %s7 = scalar_select 0, %s6, %s4
  $region1: #{parallel_sum_folded.1} parent=0
    #allocation2 [shape = 'u8[8192]{0}', space=vmem, size = 0x2000, scoped, tag = 'output window, operand 0, single buffered']
    #allocation3 [shape = 's32[1]{0}', space=sflag, size = 0x4, scoped, tag = 'scoped memory for parallel_sum_folded.1']
    %8 = vsyncpa [#allocation3], 0
    // Predicated region
    $region2: #{parallel_sum_folded.1} parent=1 // pred_check
      _
    $region3: #{parallel_sum_folded.1} parent=1 // pred_check_branch
      %10 = sbr.rel (0) target = $region5
    $region4: #{parallel_sum_folded.1} parent=1 // pred_region
      _
    $region5: #{parallel_sum_folded.1} parent=1 // pred_fallthru
      _
    // Predicated region
    $region6: #{parallel_sum_folded.1} parent=1 // pred_check
      _
    $region7: #{parallel_sum_folded.1} parent=1 // pred_check_branch
      %12 = sbr.rel (0) target = $region9
    $region8: #{parallel_sum_folded.1} parent=1 // pred_region
      _
    $region9: #{parallel_sum_folded.1} parent=1 // pred_fallthru
      _
    // Predicated region
    $region10: #{parallel_sum_folded.1} parent=1 // pred_check
      _
    $region11: #{parallel_sum_folded.1} parent=1 // pred_check_branch
      %14 = sbr.rel (0) target = $region13
    $region12: #{parallel_sum_folded.1} parent=1 // pred_region
      _
    $region13: #{parallel_sum_folded.1} parent=1 // pred_fallthru
      _
    %p15 = scmp.eq.s32.totalorder 0, 0
    // Predicated region
    $region14: #{parallel_sum_folded.1} parent=1 // pred_check
      %p16 = pneg %p15
    $region15: #{parallel_sum_folded.1} parent=1 // pred_check_branch
      %18 = sbr.rel (%p16) target = $region17
    $region16: #{parallel_sum_folded.1} parent=1 // pred_region
      %v19 = vld [vmem:[%s2] sm:$0x1]
      %v21 = vlaneseq
      %v22 = vshrl.u32 %v21, 7
      %v23 = vsub.s32 0, %v22
      %v24 = vrot.slane %v19, %v23
      %26 = vst [vmem:[#allocation2] sm:$0xff] %v24
      %27 = vst [vmem:[#allocation2 + $0x8] sm:$0xff] %v24
    $region17: #{parallel_sum_folded.1} parent=1 // pred_fallthru
      _
    %v28 = vld [vmem:[#allocation2] sm:$0xff]
    %v29 = vld [vmem:[#allocation2 + $0x8] sm:$0xff]
    %v30 = vld [vmem:[%s0] sm:$0xff]
    %v31 = vld [vmem:[%s0 + $0x8] sm:$0xff]
    %v32 = vld [vmem:[%s1] sm:$0xff]
    %v33 = vld [vmem:[%s1 + $0x8] sm:$0xff]
    %v34 = vld [vmem:[%s1 + $0x10] sm:$0xff]
    %v35 = vld [vmem:[%s1 + $0x18] sm:$0xff]
    %v36 = vld [vmem:[%s1 + $0x20] sm:$0xff]
    %v37 = vld [vmem:[%s1 + $0x28] sm:$0xff]
    %v38 = vld [vmem:[%s1 + $0x30] sm:$0xff]
    %v39 = vld [vmem:[%s1 + $0x38] sm:$0xff]
    %v40 = vld [vmem:[%s1 + $0x40] sm:$0xff]
    %v41 = vld [vmem:[%s1 + $0x48] sm:$0xff]
    %v42 = vld [vmem:[%s1 + $0x50] sm:$0xff]
    %v43 = vld [vmem:[%s1 + $0x58] sm:$0xff]
    %v44 = vld [vmem:[%s1 + $0x60] sm:$0xff]
    %v45 = vld [vmem:[%s1 + $0x68] sm:$0xff]
    %v46 = vld [vmem:[%s1 + $0x70] sm:$0xff]
    %v47 = vld [vmem:[%s1 + $0x78] sm:$0xff]
    %48 = vmatprep.subr.mxu0 0.0
    %49 = vmatpush1.msra.mxu0 %v47
    %50 = vmatprep.subr.mxu0 0.0
    %51 = vmatpush1.msra.mxu0 %v46
    %52 = vmatprep.subr.mxu0 0.0
    %53 = vmatpush1.msra.mxu0 %v45
    %54 = vmatprep.subr.mxu0 0.0
    %55 = vmatpush1.msra.mxu0 %v44
    %56 = vmatprep.subr.mxu0 0.0
    %57 = vmatpush1.msra.mxu0 %v43
    %58 = vmatprep.subr.mxu0 0.0
    %59 = vmatpush1.msra.mxu0 %v42
    %60 = vmatprep.subr.mxu0 0.0
    %61 = vmatpush1.msra.mxu0 %v41
    %62 = vmatprep.subr.mxu0 0.0
    %63 = vmatpush1.msra.mxu0 %v40
    %64 = vmatprep.subr.mxu0 0.0
    %65 = vmatpush1.msra.mxu0 %v39
    %66 = vmatprep.subr.mxu0 0.0
    %67 = vmatpush1.msra.mxu0 %v38
    %68 = vmatprep.subr.mxu0 0.0
    %69 = vmatpush1.msra.mxu0 %v37
    %70 = vmatprep.subr.mxu0 0.0
    %71 = vmatpush1.msra.mxu0 %v36
    %72 = vmatprep.subr.mxu0 0.0
    %73 = vmatpush1.msra.mxu0 %v35
    %74 = vmatprep.subr.mxu0 0.0
    %75 = vmatpush1.msra.mxu0 %v34
    %76 = vmatprep.subr.mxu0 0.0
    %77 = vmatpush1.msra.mxu0 %v33
    %78 = vmatprep.subr.mxu0 0.0
    %79 = vmatpush1.msra.mxu0 %v32
    %80 = vmatprep.subr.mxu0 0.0
    %81 = vmatpush2.msra.mxu0 0.0
    %82 = vmatprep.subr.mxu0 0.0
    %83 = vmatpush2.msra.mxu0 0.0
    %84 = vmatprep.subr.mxu0 0.0
    %85 = vmatpush2.msra.mxu0 0.0
    %86 = vmatprep.subr.mxu0 0.0
    %87 = vmatpush2.msra.mxu0 0.0
    %88 = vmatprep.subr.mxu0 0.0
    %89 = vmatpush2.msra.mxu0 0.0
    %90 = vmatprep.subr.mxu0 0.0
    %91 = vmatpush2.msra.mxu0 0.0
    %92 = vmatprep.subr.mxu0 0.0
    %93 = vmatpush2.msra.mxu0 0.0
    %94 = vmatprep.subr.mxu0 0.0
    %95 = vmatpush2.msra.mxu0 0.0
    %96 = vmatprep.subr.mxu0 0.0
    %97 = vmatpush2.msra.mxu0 0.0
    %98 = vmatprep.subr.mxu0 0.0
    %99 = vmatpush2.msra.mxu0 0.0
    %100 = vmatprep.subr.mxu0 0.0
    %101 = vmatpush2.msra.mxu0 0.0
    %102 = vmatprep.subr.mxu0 0.0
    %103 = vmatpush2.msra.mxu0 0.0
    %104 = vmatprep.subr.mxu0 0.0
    %105 = vmatpush2.msra.mxu0 0.0
    %106 = vmatprep.subr.mxu0 0.0
    %107 = vmatpush2.msra.mxu0 0.0
    %108 = vmatprep.subr.mxu0 0.0
    %109 = vmatpush2.msra.mxu0 0.0
    %110 = vmatprep.subr.mxu0 0.0
    %111 = vmatpush2.msra.mxu0 0.0
    %112 = vmatprep.mubr.f32.mxu0 0.0
    %113 = vmatmul.mubr.f32.gmra.mxu0 %v30
    %v114 = vpop.f32.mrf.mxu0
    %v115 = vadd.f32 0.0, %v114
    %v116 = vpop.f32.mrf.mxu0
    %117 = vmatprep.mubr.f32.mxu0 0.0
    %118 = vmatmul.mubr.f32.gmra.mxu0 %v31
    %v119 = vpop.f32.mrf.mxu0
    %v120 = vadd.f32 0.0, %v119
    %v121 = vpop.f32.mrf.mxu0
    %122 = vdwg.mxu0
    %v123 = vadd.f32 %v28, %v115
    %v124 = vadd.f32 %v29, %v120
    %125 = vst [vmem:[#allocation2] sm:$0xff] %v123
    %126 = vst [vmem:[#allocation2 + $0x8] sm:$0xff] %v124
    // Predicated region
    $region18: #{parallel_sum_folded.1} parent=1 // pred_check
      _
    $region19: #{parallel_sum_folded.1} parent=1 // pred_check_branch
      %128 = sbr.rel (0) target = $region21
    $region20: #{parallel_sum_folded.1} parent=1 // pred_region
      %s130 = ssub.s32 256, 256
      %131 = vsyncadd [#allocation3], %s130
      %s132 = sshll.u32 [#allocation2], 4
      %s133 = int_to_ptr.vmem [resolvable:$true] %s132
      %138 = dma.vmem_to_hbm [thread:$0]  %s133, 256, %s3, [#allocation3], 128, 128, 8
    $region21: #{parallel_sum_folded.1} parent=1 // pred_fallthru
      _
    // Predicated region
    $region22: #{parallel_sum_folded.1} parent=1 // pred_check
      _
    $region23: #{parallel_sum_folded.1} parent=1 // pred_check_branch
      %140 = sbr.rel (0) target = $region25
    $region24: #{parallel_sum_folded.1} parent=1 // pred_region
      %141 = dma.done [#allocation3], 256
    $region25: #{parallel_sum_folded.1} parent=1 // pred_fallthru
      _
    %142 = vsyncpa [#allocation3], 1

</llo_original>
